<compile_context>
chip_gen: v7x
topology: tpu7x:2x2x1
jax: 0.10.0
libtpu: 0.0.40
codegen_flags: <defaults>
</compile_context>

<pallas_src>
import jax
import jax.numpy as jnp
from jax.experimental import pallas as pl
from jax.experimental.pallas import tpu as pltpu

IN_SIZE = 7
HIDDEN_SIZE = IN_SIZE * 2   # 14
OUT_SIZE = 1

_DEFAULT_TB_MAX = 64 * 1024      # lanes per grid step (keep <=128K for v5e VMEM)
_DEFAULT_LANE_CHUNK = 8 * 1024   # in-kernel strip-mine width (multiple of 128)


def _round_up(n, m):
    return ((n + m - 1) // m) * m


def _sigmoid_1eup(x):
    # sigmoid(x) == 0.5 * tanh(0.5 * x) + 0.5 : one EUP op per element
    # (the exp + reciprocal form costs two EUP ops per element).
    return 0.5 * jnp.tanh(0.5 * x) + 0.5


def _make_kernel(n_chunks, chunk):
    def kernel(xt_ref, w1t_ref, w2_ref, ot_ref):
        w1t = w1t_ref[...]            # (14, 7)  resident across the grid step
        w2 = w2_ref[...]              # (14, 1)  resident

        def fwd(xt):                  # xt: (7, chunk) f32, batch on lanes
            # Layer 1 on the MXU: (14,7) @ (7,chunk) -> (14,chunk); N lane-dense.
            z = jnp.dot(w1t, xt, preferred_element_type=jnp.float32)
            z2 = _sigmoid_1eup(z)
            # Layer 2 (out_features=1): skip the MXU (M=1 would be <1% utilized);
            # broadcast-FMA on the VPU + sublane reduce on the XLU.
            z3 = jnp.sum(w2 * z2, axis=0, keepdims=True)       # (1, chunk)
            return _sigmoid_1eup(z3)

        if n_chunks == 1:
            ot_ref[...] = fwd(xt_ref[...]).astype(ot_ref.dtype)
        else:
            # Strip-mine the lane axis: bounds instruction count / vreg pressure
            # for very wide tiles while keeping one big DMA per grid step.
            @pl.loop(0, n_chunks)
            def _(c):
                start = pl.multiple_of(c * chunk, chunk)
                ot_ref[:, pl.ds(start, chunk)] = fwd(
                    xt_ref[:, pl.ds(start, chunk)]).astype(ot_ref.dtype)

    return kernel


def nn_forward(x, w1, w2, *, tb_max=_DEFAULT_TB_MAX,
               lane_chunk=_DEFAULT_LANE_CHUNK, feature_major=False,
               force_pallas=False, min_pallas_batch=1024):
    """Forward pass of the 7 -> 14 -> 1 sigmoid MLP.

    x : (B, 7) batch-major (PyTorch convention), or (7, B) if feature_major.
    Returns (B, 1) float32, matching NeuralNetwork.forward.
    """
    assert lane_chunk > 0 and lane_chunk % 128 == 0, lane_chunk

    xt = (x if feature_major else jnp.transpose(x)).astype(jnp.float32)  # (7, B)
    assert xt.shape[0] == IN_SIZE, xt.shape
    B = xt.shape[1]

    w1f = w1.astype(jnp.float32)                   # (7, 14)
    w2f = w2.astype(jnp.float32)                   # (14, 1)

    # Small-batch fast path: a standalone pallas_call (~1 us launch + layout ops)
    # can never be amortized at tiny B -- let XLA fuse the whole thing.
    if B < min_pallas_batch and not force_pallas:
        z2 = jax.nn.sigmoid(jnp.dot(jnp.transpose(xt), w1f))
        return jax.nn.sigmoid(jnp.dot(z2, w2f))

    w1t = jnp.transpose(w1f)                       # (14, 7)

    # Pad only when the whole batch is smaller than one lane tile (128); larger
    # batches rely on Pallas edge-block handling instead of paying a full extra
    # HBM pass for jnp.pad.
    b_eff = B
    if B < 128:
        b_eff = 128
        xt = jnp.pad(xt, ((0, 0), (0, b_eff - B)))

    # Batch tile: big enough to amortize per-grid-step overhead, >=2 tiles when
    # the batch allows it (v7x megacore), 128-lane aligned, and a multiple of
    # the in-kernel chunk when strip-mining kicks in.
    tb = max(128, min(tb_max, _round_up(pl.cdiv(b_eff, 2), 128)))
    if tb > lane_chunk:
        tb = _round_up(tb, lane_chunk)
        chunk, n_chunks = lane_chunk, tb // lane_chunk
    else:
        chunk, n_chunks = tb, 1
    n_tiles = pl.cdiv(b_eff, tb)

    out_t = pl.pallas_call(
        _make_kernel(n_chunks, chunk),
        out_shape=jax.ShapeDtypeStruct((OUT_SIZE, b_eff), jnp.float32),
        grid_spec=pltpu.PrefetchScalarGridSpec(
            num_scalar_prefetch=0,
            grid=(n_tiles,),
            in_specs=[
                pl.BlockSpec((IN_SIZE, tb), lambda i: (0, i)),            # Xt tile
                pl.BlockSpec((HIDDEN_SIZE, IN_SIZE), lambda i: (0, 0)),   # W1t
                pl.BlockSpec((HIDDEN_SIZE, OUT_SIZE), lambda i: (0, 0)),  # W2
            ],
            out_specs=pl.BlockSpec((OUT_SIZE, tb), lambda i: (0, i)),
        ),
        compiler_params=pltpu.CompilerParams(
            # Independent batch tiles -> megacore sharding on v7x (no-op on
            # single-TC v5e/v6e).  VMEM (~2*(7+1)*tb*4 B double-buffered) stays
            # under every generation's scoped default for tb <= 128K.
            dimension_semantics=("parallel",),
        ),
    )(xt, w1t, w2f)

    # (1, b_eff) -> (B, 1); transposing a (1, N) array is layout-free.
    return jnp.transpose(out_t[:, :B])


def reference_forward(x, w1, w2):
    z2 = jax.nn.sigmoid(x @ w1)
    return jax.nn.sigmoid(z2 @ w2)


if __name__ == "__main__":
    key = jax.random.PRNGKey(0)
    k_x, k_w1, k_w2 = jax.random.split(key, 3)

    # Deterministic "randn"-style params matching the torch module shapes.
    w1 = jax.random.normal(k_w1, (IN_SIZE, HIDDEN_SIZE), dtype=jnp.float32)
    w2 = jax.random.normal(k_w2, (HIDDEN_SIZE, OUT_SIZE), dtype=jnp.float32)

    # Case 1: tiny batch, kernel path forced (single tile, single chunk).
    B = 8
    x = jax.random.normal(k_x, (B, IN_SIZE), dtype=jnp.float32)
    out = jax.block_until_ready(nn_forward(x, w1, w2, force_pallas=True))
    ref = reference_forward(x, w1, w2)
    assert out.shape == (B, OUT_SIZE), out.shape
    assert jnp.allclose(out, ref, atol=1e-4, rtol=1e-4), (out, ref)

    # Case 2: non-tile-aligned batch -> ragged edge block (no wrapper pad),
    # multi-tile grid, and the in-kernel lane-chunk loop.
    B2 = 300
    x2 = jax.random.normal(jax.random.PRNGKey(1), (B2, IN_SIZE), dtype=jnp.float32)
    out2 = jax.block_until_ready(
        nn_forward(x2, w1, w2, tb_max=256, lane_chunk=128, force_pallas=True))
    ref2 = reference_forward(x2, w1, w2)
    assert out2.shape == (B2, OUT_SIZE), out2.shape
    assert jnp.allclose(out2, ref2, atol=1e-4, rtol=1e-4), (out2, ref2)

    # Case 3: feature-major input (no wrapper transpose HBM pass), same kernel.
    out3 = jax.block_until_ready(
        nn_forward(jnp.transpose(x2), w1, w2, tb_max=256, lane_chunk=128,
                   feature_major=True, force_pallas=True))
    assert out3.shape == (B2, OUT_SIZE), out3.shape
    assert jnp.allclose(out3, ref2, atol=1e-4, rtol=1e-4), (out3, ref2)

    # Case 4: small-batch fast path (no pallas launch; pure XLA fusion).
    out4 = jax.block_until_ready(nn_forward(x, w1, w2))
    assert out4.shape == (B, OUT_SIZE), out4.shape
    assert jnp.allclose(out4, ref, atol=1e-5, rtol=1e-5), (out4, ref)

    print("KERNEL_OK")
</pallas_src>

<mosaic_0001>
module attributes {stable_mosaic.version = 11 : i64} {
  func.func @kernel(%arg0: i32, %arg1: memref<7x128xf32, #tpu.memory_space<vmem>>, %arg2: memref<14x7xf32, #tpu.memory_space<vmem>>, %arg3: memref<14x1xf32, #tpu.memory_space<vmem>>, %arg4: memref<1x128xf32, #tpu.memory_space<vmem>>) attributes {dimension_semantics = [#tpu.dimension_semantics<parallel>], iteration_bounds = array<i64: 1>, scalar_prefetch = 0 : i64, scratch_operands = 0 : i64, tpu.core_type = #tpu.core_type<tc>, window_params = [{transform_indices = @transform_0, window_bounds = array<i64: 7, 128>}, {pipeline_mode = #tpu.pipeline_mode<synchronous>, transform_indices = @transform_1, window_bounds = array<i64: 14, 7>}, {pipeline_mode = #tpu.pipeline_mode<synchronous>, transform_indices = @transform_2, window_bounds = array<i64: 14, 1>}, {transform_indices = @transform_3, window_bounds = array<i64: 1, 128>}]} {
    %c0 = arith.constant 0 : index
    %c0_0 = arith.constant 0 : index
    %0 = vector.load %arg2[%c0, %c0_0] : memref<14x7xf32, #tpu.memory_space<vmem>>, vector<14x7xf32>
    %c0_1 = arith.constant 0 : index
    %c0_2 = arith.constant 0 : index
    %1 = vector.load %arg3[%c0_1, %c0_2] : memref<14x1xf32, #tpu.memory_space<vmem>>, vector<14x1xf32>
    %c0_3 = arith.constant 0 : index
    %c0_4 = arith.constant 0 : index
    %2 = vector.load %arg1[%c0_3, %c0_4] : memref<7x128xf32, #tpu.memory_space<vmem>>, vector<7x128xf32>
    %cst = arith.constant dense<0.000000e+00> : vector<14x128xf32>
    %3 = tpu.matmul %0, %2, %cst {dimension_numbers = #tpu.dot_dimension_numbers<[1], [0], [0], [1], [0, 0, 1, 1], [], []>} : vector<14x7xf32>, vector<7x128xf32>, vector<14x128xf32> -> vector<14x128xf32>
    %cst_5 = arith.constant 5.000000e-01 : f32
    %4 = vector.broadcast %cst_5 : f32 to vector<14x128xf32>
    %5 = arith.mulf %4, %3 : vector<14x128xf32>
    %6 = math.tanh %5 : vector<14x128xf32>
    %cst_6 = arith.constant 5.000000e-01 : f32
    %7 = vector.broadcast %cst_6 : f32 to vector<14x128xf32>
    %8 = arith.mulf %7, %6 : vector<14x128xf32>
    %cst_7 = arith.constant 5.000000e-01 : f32
    %9 = vector.broadcast %cst_7 : f32 to vector<14x128xf32>
    %10 = arith.addf %8, %9 : vector<14x128xf32>
    %11 = vector.broadcast %1 : vector<14x1xf32> to vector<14x128xf32>
    %12 = arith.mulf %11, %10 : vector<14x128xf32>
    %cst_8 = arith.constant dense<0.000000e+00> : vector<128xf32>
    %13 = vector.multi_reduction <add>, %12, %cst_8 [0] : vector<14x128xf32> to vector<128xf32>
    %14 = vector.shape_cast %13 : vector<128xf32> to vector<1x128xf32>
    %cst_9 = arith.constant 5.000000e-01 : f32
    %15 = vector.broadcast %cst_9 : f32 to vector<1x128xf32>
    %16 = arith.mulf %15, %14 : vector<1x128xf32>
    %17 = math.tanh %16 : vector<1x128xf32>
    %cst_10 = arith.constant 5.000000e-01 : f32
    %18 = vector.broadcast %cst_10 : f32 to vector<1x128xf32>
    %19 = arith.mulf %18, %17 : vector<1x128xf32>
    %cst_11 = arith.constant 5.000000e-01 : f32
    %20 = vector.broadcast %cst_11 : f32 to vector<1x128xf32>
    %21 = arith.addf %19, %20 : vector<1x128xf32>
    %c0_12 = arith.constant 0 : index
    %c0_13 = arith.constant 0 : index
    %22 = vector.load %arg4[%c0_12, %c0_13] : memref<1x128xf32, #tpu.memory_space<vmem>>, vector<1x128xf32>
    tpu.vector_store %arg4[%c0_12, %c0_13], %21 {strides = array<i32>} : memref<1x128xf32, #tpu.memory_space<vmem>>, vector<1x128xf32>,
    return
  }
  func.func @transform_0(%arg0: i32) -> (i32, i32) {
    %c0_i32 = arith.constant 0 : i32
    %c0_i32_0 = arith.constant 0 : i32
    return %c0_i32, %arg0 : i32, i32
  }
  func.func @transform_1(%arg0: i32) -> (i32, i32) {
    %c0_i32 = arith.constant 0 : i32
    %c0_i32_0 = arith.constant 0 : i32
    %c0_i32_1 = arith.constant 0 : i32
    return %c0_i32, %c0_i32_0 : i32, i32
  }
  func.func @transform_2(%arg0: i32) -> (i32, i32) {
    %c0_i32 = arith.constant 0 : i32
    %c0_i32_0 = arith.constant 0 : i32
    %c0_i32_1 = arith.constant 0 : i32
    return %c0_i32, %c0_i32_0 : i32, i32
  }
  func.func @transform_3(%arg0: i32) -> (i32, i32) {
    %c0_i32 = arith.constant 0 : i32
    %c0_i32_0 = arith.constant 0 : i32
    return %c0_i32, %arg0 : i32, i32
  }
}

</mosaic_0001>

<llo_original>
// kernel: tpu_custom_call.1
$region0: #{tpu_custom_call.1}
  #allocation0 [shape = 'u32[]', space=smem, size = 0x4, offset = 0x4, fixed_abs, tag = 'smem constant byte address 0x4 - core index']
  #allocation1 [shape = 'u32[144,128]{1,0:T(1,128)}', space=vmem, size = 0x12000, scoped, tag = 'internal scratch']
  %s0 = inlined_call_operand.vmem [shape: f32[7,128], index: 0, kind: input, shape index: {}]
  %s1 = inlined_call_operand.vmem [shape: f32[14,7], index: 1, kind: input, shape index: {}]
  %s2 = inlined_call_operand.vmem [shape: f32[14,1], index: 2, kind: input, shape index: {}]
  %s3 = inlined_call_operand.hbm [shape: f32[1,128], index: 3, kind: output, shape index: {}]
  %s4 = sld [smem:[#allocation0]]
  $region22: #{tpu_custom_call.1} parent=0
    _
  %s6 = ssub.s32 1, %s4
  %s7 = scalar_select 0, %s6, %s4
  $region1: #{tpu_custom_call.1} parent=0
    #allocation2 [shape = 'u8[512]{0}', space=vmem, size = 0x400, scoped, tag = 'output window, operand 0, single buffered']
    #allocation3 [shape = 's32[1]{0}', space=sflag, size = 0x4, scoped, tag = 'scoped memory for tpu_custom_call.1']
    %8 = vsyncpa [#allocation3], 0
    // Predicated region
    $region2: #{tpu_custom_call.1} parent=1 // pred_check
      _
    $region3: #{tpu_custom_call.1} parent=1 // pred_check_branch
      %10 = sbr.rel (0) target = $region5
    $region4: #{tpu_custom_call.1} parent=1 // pred_region
      _
    $region5: #{tpu_custom_call.1} parent=1 // pred_fallthru
      _
    // Predicated region
    $region6: #{tpu_custom_call.1} parent=1 // pred_check
      _
    $region7: #{tpu_custom_call.1} parent=1 // pred_check_branch
      %12 = sbr.rel (0) target = $region9
    $region8: #{tpu_custom_call.1} parent=1 // pred_region
      _
    $region9: #{tpu_custom_call.1} parent=1 // pred_fallthru
      _
    // Predicated region
    $region10: #{tpu_custom_call.1} parent=1 // pred_check
      _
    $region11: #{tpu_custom_call.1} parent=1 // pred_check_branch
      %14 = sbr.rel (0) target = $region13
    $region12: #{tpu_custom_call.1} parent=1 // pred_region
      _
    $region13: #{tpu_custom_call.1} parent=1 // pred_fallthru
      _
    %v15 = vld [vmem:[%s1] sm:$0xff]
    %v16 = vld [vmem:[%s1 + $0x8] sm:$0x3f]
    %v17 = vld [vmem:[%s2] sm:$0xff]
    %v18 = vld [vmem:[%s2 + $0x8] sm:$0x3f]
    %v19 = vld [vmem:[%s0] sm:$0x7f]
    %vm20 = vcmask 56320
    %v22 = vsel %vm20, %v15, 0
    %v25 = vsel %vm20, %v16, 0
    %vm27 = vcmask 1046528
    %v29 = vsel %vm27, %v19, 0
    %31 = vmatprep.subr.mxu0 0.0
    %32 = vmatpush1.msra.mxu0 %v29
    %33 = vmatprep.subr.mxu0 0.0
    %34 = vmatpush1.msra.mxu0 0.0
    %35 = vmatprep.subr.mxu0 0.0
    %36 = vmatpush1.msra.mxu0 0.0
    %37 = vmatprep.subr.mxu0 0.0
    %38 = vmatpush1.msra.mxu0 0.0
    %39 = vmatprep.subr.mxu0 0.0
    %40 = vmatpush1.msra.mxu0 0.0
    %41 = vmatprep.subr.mxu0 0.0
    %42 = vmatpush1.msra.mxu0 0.0
    %43 = vmatprep.subr.mxu0 0.0
    %44 = vmatpush1.msra.mxu0 0.0
    %45 = vmatprep.subr.mxu0 0.0
    %46 = vmatpush1.msra.mxu0 0.0
    %47 = vmatprep.subr.mxu0 0.0
    %48 = vmatpush1.msra.mxu0 0.0
    %49 = vmatprep.subr.mxu0 0.0
    %50 = vmatpush1.msra.mxu0 0.0
    %51 = vmatprep.subr.mxu0 0.0
    %52 = vmatpush1.msra.mxu0 0.0
    %53 = vmatprep.subr.mxu0 0.0
    %54 = vmatpush1.msra.mxu0 0.0
    %55 = vmatprep.subr.mxu0 0.0
    %56 = vmatpush1.msra.mxu0 0.0
    %57 = vmatprep.subr.mxu0 0.0
    %58 = vmatpush1.msra.mxu0 0.0
    %59 = vmatprep.subr.mxu0 0.0
    %60 = vmatpush1.msra.mxu0 0.0
    %61 = vmatprep.subr.mxu0 0.0
    %62 = vmatpush1.msra.mxu0 0.0
    %63 = vmatprep.subr.mxu0 0.0
    %64 = vmatpush1.msra.mxu0 0.0
    %65 = vmatprep.subr.mxu0 0.0
    %66 = vmatpush1.msra.mxu0 0.0
    %67 = vmatprep.subr.mxu0 0.0
    %68 = vmatpush1.msra.mxu0 0.0
    %69 = vmatprep.subr.mxu0 0.0
    %70 = vmatpush1.msra.mxu0 0.0
    %71 = vmatprep.subr.mxu0 0.0
    %72 = vmatpush1.msra.mxu0 0.0
    %73 = vmatprep.subr.mxu0 0.0
    %74 = vmatpush1.msra.mxu0 0.0
    %75 = vmatprep.subr.mxu0 0.0
    %76 = vmatpush1.msra.mxu0 0.0
    %77 = vmatprep.subr.mxu0 0.0
    %78 = vmatpush1.msra.mxu0 0.0
    %79 = vmatprep.subr.mxu0 0.0
    %80 = vmatpush1.msra.mxu0 0.0
    %81 = vmatprep.subr.mxu0 0.0
    %82 = vmatpush1.msra.mxu0 0.0
    %83 = vmatprep.subr.mxu0 0.0
    %84 = vmatpush1.msra.mxu0 0.0
    %85 = vmatprep.subr.mxu0 0.0
    %86 = vmatpush1.msra.mxu0 0.0
    %87 = vmatprep.subr.mxu0 0.0
    %88 = vmatpush1.msra.mxu0 0.0
    %89 = vmatprep.subr.mxu0 0.0
    %90 = vmatpush1.msra.mxu0 0.0
    %91 = vmatprep.subr.mxu0 0.0
    %92 = vmatpush1.msra.mxu0 0.0
    %93 = vmatprep.subr.mxu0 0.0
    %94 = vmatpush1.msra.mxu0 0.0
    %95 = vmatprep.mubr.f32.mxu0 0.0
    %96 = vmatmul.mubr.f32.gmra.mrb[0].mxu0 %v22
    %v97 = vpop.f32.mrb[0].mxu0
    %v98 = vadd.f32 0.0, %v97
    %v99 = vpop.f32.mrb[0].mxu0
    %100 = vmatprep.mubr.f32.mxu0 0.0
    %101 = vmatmul.mubr.f32.gmra.mrb[0].mxu0 %v25
    %v102 = vpop.f32.mrb[0].mxu0
    %v103 = vadd.f32 0.0, %v102
    %v104 = vpop.f32.mrb[0].mxu0
    %105 = vdwg.mxu0
    %v106 = vmul.f32 %v98, 0.5
    %v107 = vmul.f32 %v103, 0.5
    %v108 = vtanh.pop %v106
    %v109 = vtanh.pop %v107
    %v110 = vmul.f32 %v108, 0.5
    %v111 = vmul.f32 %v109, 0.5
    %v112 = vadd.f32 %v110, 0.5
    %v113 = vadd.f32 %v111, 0.5
    %115 = vset.pattern.permute.xlu0 0
    %116 = vperm.xlu0 %115, %v17
    %v117 = vpop.permute.xlu0 %116
    %120 = vset.pattern.permute.xlu0 0
    %121 = vperm.xlu0 %120, %v18
    %v122 = vpop.permute.xlu0 %121
    %v124 = vmul.f32 %v117, %v112
    %v125 = vmul.f32 %v122, %v113
    %vm126 = vcmask 1045504
    %v127 = vsel %vm126, %v125, 0.0
    %v128 = vadd.f32 %v124, %v127
    %v129 = vrot.slane %v128, 4
    %v130 = vadd.f32 %v128, %v129
    %v131 = vrot.slane %v130, 2
    %v132 = vadd.f32 %v130, %v131
    %v133 = vrot.slane %v132, 1
    %v134 = vadd.f32 %v132, %v133
    %v135 = vmul.f32 %v134, 0.5
    %v136 = vtanh.pop %v135
    %v137 = vmul.f32 %v136, 0.5
    %v138 = vadd.f32 %v137, 0.5
    %139 = vst [vmem:[#allocation2] sm:$0x1] %v138
    // Predicated region
    $region14: #{tpu_custom_call.1} parent=1 // pred_check
      _
    $region15: #{tpu_custom_call.1} parent=1 // pred_check_branch
      %141 = sbr.rel (0) target = $region17
    $region16: #{tpu_custom_call.1} parent=1 // pred_region
      %s143 = ssub.s32 16, 16
      %144 = vsyncadd [#allocation3], %s143
      %s146 = sshll.u32 [#allocation2], 4
      %s147 = int_to_ptr.vmem [resolvable:$true] %s146
      %149 = dma.vmem_to_hbm [thread:$0]  %s147, 16, %s3, [#allocation3]
    $region17: #{tpu_custom_call.1} parent=1 // pred_fallthru
      _
    // Predicated region
    $region18: #{tpu_custom_call.1} parent=1 // pred_check
      _
    $region19: #{tpu_custom_call.1} parent=1 // pred_check_branch
      %151 = sbr.rel (0) target = $region21
    $region20: #{tpu_custom_call.1} parent=1 // pred_region
      %152 = dma.done [#allocation3], 16
    $region21: #{tpu_custom_call.1} parent=1 // pred_fallthru
      _
    %153 = vsyncpa [#allocation3], 1

</llo_original>
